<compile_context>
chip_gen: v5e
topology: v5e:2x2
jax: 0.10.0
libtpu: 0.0.40
codegen_flags: <defaults>
</compile_context>

<pallas_src>
import jax
import jax.numpy as jnp
from jax import lax
from jax.experimental import pallas as pl
from jax.experimental.pallas import tpu as pltpu


def make_actor_kernel(lr_min: float, lr_max: float):
    """Returns the kernel body with lr_range baked in as Python constants."""

    def actor_kernel(x_ref, w1_ref, b1_ref, w2_ref, b2_ref, w3_ref, b3_ref,
                     out_ref):
        # bf16 MXU inputs, f32 accumulation.
        x = x_ref[...].astype(jnp.bfloat16)                      # (TB, obs_dim)

        # fc1 + ReLU
        h1 = jnp.dot(x, w1_ref[...], preferred_element_type=jnp.float32)
        h1 = jnp.maximum(h1 + b1_ref[...], 0.0).astype(jnp.bfloat16)   # (TB, 256)

        # fc2 + ReLU
        h2 = jnp.dot(h1, w2_ref[...], preferred_element_type=jnp.float32)
        h2 = jnp.maximum(h2 + b2_ref[...], 0.0).astype(jnp.bfloat16)   # (TB, 128)

        # out layer (head math in f32)
        raw = jnp.dot(h2, w3_ref[...], preferred_element_type=jnp.float32)
        raw = raw + b3_ref[...]                                  # (TB, 5)

        # --- head post-processing (vectorized via lane masks, no tiny slices) ---
        col = lax.broadcasted_iota(jnp.int32, raw.shape, 1)
        is_lr = col == 0
        is_mix = jnp.logical_and(col >= 1, col <= 3)

        # sigmoid via EUP exp + EUP reciprocal (off the VALU slots)
        sig = pl.reciprocal(1.0 + jnp.exp(-raw), approx=True)
        lr = lr_min + (lr_max - lr_min) * sig                    # column-0 semantics

        # masked softmax over columns 1..3 only
        masked = jnp.where(is_mix, raw, jnp.full_like(raw, -1e30))
        m = jnp.max(masked, axis=-1, keepdims=True)
        e = jnp.where(is_mix, jnp.exp(raw - m), 0.0)
        s = jnp.sum(e, axis=-1, keepdims=True)
        mix = e * pl.reciprocal(s, approx=True)

        # col 0 -> scaled lr, cols 1..3 -> softmax mix, col 4 -> sigmoid
        action = jnp.where(is_mix, mix, sig)
        action = jnp.where(is_lr, lr, action)
        out_ref[...] = action.astype(out_ref.dtype)

    return actor_kernel


def actor_forward(x, params, lr_range, *, block_rows=1024):
    """x: (B, obs_dim) float32. params: dict of weights/biases.

    Returns (B, action_dim) float32 actions.
    """
    w1, b1, w2, b2, w3, b3 = (params["w1"], params["b1"], params["w2"],
                              params["b2"], params["w3"], params["b3"])
    B, obs_dim = x.shape
    h1_dim = w1.shape[1]
    h2_dim = w2.shape[1]
    action_dim = w3.shape[1]
    assert action_dim == 5, (
        "head layout (lr | 3-way mix | sample usage) requires action_dim == 5")

    # Batch tile: multiple of 8 (f32 sublane), capped at block_rows.
    def round_up(a, m):
        return ((a + m - 1) // m) * m

    tb = min(round_up(block_rows, 8), round_up(B, 8))
    b_pad = round_up(B, tb)
    if b_pad != B:
        x = jnp.pad(x, ((0, b_pad - B), (0, 0)))

    # Cast weights to bf16 once in the wrapper (halves weight DMA; bf16-native MXU).
    w1b = w1.astype(jnp.bfloat16)
    w2b = w2.astype(jnp.bfloat16)
    w3b = w3.astype(jnp.bfloat16)

    kernel = make_actor_kernel(float(lr_range[0]), float(lr_range[1]))
    grid = (b_pad // tb,)

    const = lambda i: (0, 0)  # weights/biases: same block every step -> stay resident
    out = pl.pallas_call(
        kernel,
        out_shape=jax.ShapeDtypeStruct((b_pad, action_dim), jnp.float32),
        grid=grid,
        in_specs=[
            pl.BlockSpec((tb, obs_dim), lambda i: (i, 0)),   # x tile (double-buffered)
            pl.BlockSpec((obs_dim, h1_dim), const),          # w1
            pl.BlockSpec((1, h1_dim), const),                # b1
            pl.BlockSpec((h1_dim, h2_dim), const),           # w2
            pl.BlockSpec((1, h2_dim), const),                # b2
            pl.BlockSpec((h2_dim, action_dim), const),       # w3
            pl.BlockSpec((1, action_dim), const),            # b3
        ],
        out_specs=pl.BlockSpec((tb, action_dim), lambda i: (i, 0)),
        compiler_params=pltpu.CompilerParams(
            dimension_semantics=("parallel",),               # megacore on v7x
            vmem_limit_bytes=32 * 1024 * 1024,               # covers v5e's 16 MiB default
        ),
    )(x, w1b, b1, w2b, b2, w3b, b3)

    return out[:B] if b_pad != B else out


def init_actor_params(key, obs_dim, action_dim=5):
    """Deterministic init mirroring PyTorch Linear default (uniform +-1/sqrt(fan_in))."""
    def linear(key, fan_in, fan_out):
        kw, kb = jax.random.split(key)
        bound = 1.0 / jnp.sqrt(fan_in)
        w = jax.random.uniform(kw, (fan_in, fan_out), jnp.float32, -bound, bound)
        b = jax.random.uniform(kb, (1, fan_out), jnp.float32, -bound, bound)
        return w, b

    k1, k2, k3 = jax.random.split(key, 3)
    w1, b1 = linear(k1, obs_dim, 256)
    w2, b2 = linear(k2, 256, 128)
    w3, b3 = linear(k3, 128, action_dim)
    return {"w1": w1, "b1": b1, "w2": w2, "b2": b2, "w3": w3, "b3": b3}


def actor_reference(x, params, lr_range):
    """Pure-JAX (f32) reference for correctness checking."""
    h1 = jnp.maximum(x @ params["w1"] + params["b1"], 0.0)
    h2 = jnp.maximum(h1 @ params["w2"] + params["b2"], 0.0)
    raw = h2 @ params["w3"] + params["b3"]
    lr = lr_range[0] + (lr_range[1] - lr_range[0]) * jax.nn.sigmoid(raw[:, 0:1])
    mix = jax.nn.softmax(raw[:, 1:4], axis=-1)
    sample_usage = jax.nn.sigmoid(raw[:, 4:5])
    return jnp.concatenate([lr, mix, sample_usage], axis=-1)


if __name__ == "__main__":
    key = jax.random.PRNGKey(0)
    k_params, k_x1, k_x2 = jax.random.split(key, 3)

    obs_dim = 32
    action_dim = 5
    lr_range = (1e-5, 1e-2)
    params = init_actor_params(k_params, obs_dim, action_dim)

    # Tolerance is relaxed vs the f32 reference because the matmuls run with
    # bf16 MXU inputs (f32 accumulation) and the head uses approx reciprocals.
    TOL = 1e-2

    # 1) Small batch (single grid step).
    batch = 8
    x = jax.random.normal(k_x1, (batch, obs_dim), dtype=jnp.float32)
    out = jax.block_until_ready(actor_forward(x, params, lr_range))
    ref = actor_reference(x, params, lr_range)
    assert out.shape == (batch, action_dim)
    assert bool(jnp.all(jnp.isfinite(out)))
    assert jnp.allclose(out, ref, atol=TOL, rtol=TOL), "mismatch vs reference (B=8)"
    # mixing ratios must sum to ~1
    assert bool(jnp.all(jnp.abs(jnp.sum(out[:, 1:4], axis=-1) - 1.0) < 1e-2))

    # 2) Ragged batch with a small tile to exercise the grid + pad/slice path.
    batch2 = 41
    x2 = jax.random.normal(k_x2, (batch2, obs_dim), dtype=jnp.float32)
    out2 = jax.block_until_ready(actor_forward(x2, params, lr_range, block_rows=16))
    ref2 = actor_reference(x2, params, lr_range)
    assert out2.shape == (batch2, action_dim)
    assert jnp.allclose(out2, ref2, atol=TOL, rtol=TOL), "mismatch vs reference (B=41)"

    print("KERNEL_OK")
</pallas_src>

<mosaic_0001>
module attributes {stable_mosaic.version = 11 : i64} {
  func.func @actor_kernel(%arg0: i32, %arg1: memref<8x32xf32, #tpu.memory_space<vmem>>, %arg2: memref<32x256xbf16, #tpu.memory_space<vmem>>, %arg3: memref<1x256xf32, #tpu.memory_space<vmem>>, %arg4: memref<256x128xbf16, #tpu.memory_space<vmem>>, %arg5: memref<1x128xf32, #tpu.memory_space<vmem>>, %arg6: memref<128x5xbf16, #tpu.memory_space<vmem>>, %arg7: memref<1x5xf32, #tpu.memory_space<vmem>>, %arg8: memref<8x5xf32, #tpu.memory_space<vmem>>) attributes {dimension_semantics = [#tpu.dimension_semantics<parallel>], iteration_bounds = array<i64: 1>, scalar_prefetch = 0 : i64, scratch_operands = 0 : i64, tpu.core_type = #tpu.core_type<tc>, window_params = [{transform_indices = @transform_0, window_bounds = array<i64: 8, 32>}, {pipeline_mode = #tpu.pipeline_mode<synchronous>, transform_indices = @transform_1, window_bounds = array<i64: 32, 256>}, {pipeline_mode = #tpu.pipeline_mode<synchronous>, transform_indices = @transform_2, window_bounds = array<i64: 1, 256>}, {pipeline_mode = #tpu.pipeline_mode<synchronous>, transform_indices = @transform_3, window_bounds = array<i64: 256, 128>}, {pipeline_mode = #tpu.pipeline_mode<synchronous>, transform_indices = @transform_4, window_bounds = array<i64: 1, 128>}, {pipeline_mode = #tpu.pipeline_mode<synchronous>, transform_indices = @transform_5, window_bounds = array<i64: 128, 5>}, {pipeline_mode = #tpu.pipeline_mode<synchronous>, transform_indices = @transform_6, window_bounds = array<i64: 1, 5>}, {transform_indices = @transform_7, window_bounds = array<i64: 8, 5>}]} {
    %c0 = arith.constant 0 : index
    %c0_0 = arith.constant 0 : index
    %0 = vector.load %arg1[%c0, %c0_0] : memref<8x32xf32, #tpu.memory_space<vmem>>, vector<8x32xf32>
    %1 = arith.truncf %0 : vector<8x32xf32> to vector<8x32xbf16>
    %c0_1 = arith.constant 0 : index
    %c0_2 = arith.constant 0 : index
    %2 = vector.load %arg2[%c0_1, %c0_2] : memref<32x256xbf16, #tpu.memory_space<vmem>>, vector<32x256xbf16>
    %cst = arith.constant dense<0.000000e+00> : vector<8x256xf32>
    %3 = tpu.matmul %1, %2, %cst {dimension_numbers = #tpu.dot_dimension_numbers<[1], [0], [0], [1], [0, 0, 1, 1], [], []>} : vector<8x32xbf16>, vector<32x256xbf16>, vector<8x256xf32> -> vector<8x256xf32>
    %c0_3 = arith.constant 0 : index
    %c0_4 = arith.constant 0 : index
    %4 = vector.load %arg3[%c0_3, %c0_4] : memref<1x256xf32, #tpu.memory_space<vmem>>, vector<1x256xf32>
    %5 = vector.broadcast %4 : vector<1x256xf32> to vector<8x256xf32>
    %6 = arith.addf %3, %5 : vector<8x256xf32>
    %cst_5 = arith.constant 0.000000e+00 : f32
    %7 = vector.broadcast %cst_5 : f32 to vector<8x256xf32>
    %8 = arith.maximumf %6, %7 : vector<8x256xf32>
    %9 = arith.truncf %8 : vector<8x256xf32> to vector<8x256xbf16>
    %c0_6 = arith.constant 0 : index
    %c0_7 = arith.constant 0 : index
    %10 = vector.load %arg4[%c0_6, %c0_7] : memref<256x128xbf16, #tpu.memory_space<vmem>>, vector<256x128xbf16>
    %cst_8 = arith.constant dense<0.000000e+00> : vector<8x128xf32>
    %11 = tpu.matmul %9, %10, %cst_8 {dimension_numbers = #tpu.dot_dimension_numbers<[1], [0], [0], [1], [0, 0, 1, 1], [], []>} : vector<8x256xbf16>, vector<256x128xbf16>, vector<8x128xf32> -> vector<8x128xf32>
    %c0_9 = arith.constant 0 : index
    %c0_10 = arith.constant 0 : index
    %12 = vector.load %arg5[%c0_9, %c0_10] : memref<1x128xf32, #tpu.memory_space<vmem>>, vector<1x128xf32>
    %13 = vector.broadcast %12 : vector<1x128xf32> to vector<8x128xf32>
    %14 = arith.addf %11, %13 : vector<8x128xf32>
    %cst_11 = arith.constant 0.000000e+00 : f32
    %15 = vector.broadcast %cst_11 : f32 to vector<8x128xf32>
    %16 = arith.maximumf %14, %15 : vector<8x128xf32>
    %17 = arith.truncf %16 : vector<8x128xf32> to vector<8x128xbf16>
    %c0_12 = arith.constant 0 : index
    %c0_13 = arith.constant 0 : index
    %18 = vector.load %arg6[%c0_12, %c0_13] : memref<128x5xbf16, #tpu.memory_space<vmem>>, vector<128x5xbf16>
    %cst_14 = arith.constant dense<0.000000e+00> : vector<8x5xf32>
    %19 = tpu.matmul %17, %18, %cst_14 {dimension_numbers = #tpu.dot_dimension_numbers<[1], [0], [0], [1], [0, 0, 1, 1], [], []>} : vector<8x128xbf16>, vector<128x5xbf16>, vector<8x5xf32> -> vector<8x5xf32>
    %c0_15 = arith.constant 0 : index
    %c0_16 = arith.constant 0 : index
    %20 = vector.load %arg7[%c0_15, %c0_16] : memref<1x5xf32, #tpu.memory_space<vmem>>, vector<1x5xf32>
    %21 = vector.broadcast %20 : vector<1x5xf32> to vector<8x5xf32>
    %22 = arith.addf %19, %21 : vector<8x5xf32>
    %23 = tpu.iota {dimensions = array<i32: 1>} : vector<8x5xi32>
    %c0_i32 = arith.constant 0 : i32
    %24 = vector.broadcast %c0_i32 : i32 to vector<8x5xi32>
    %25 = arith.cmpi eq, %23, %24 : vector<8x5xi32>
    %c1_i32 = arith.constant 1 : i32
    %26 = vector.broadcast %c1_i32 : i32 to vector<8x5xi32>
    %27 = arith.cmpi sge, %23, %26 : vector<8x5xi32>
    %c3_i32 = arith.constant 3 : i32
    %28 = vector.broadcast %c3_i32 : i32 to vector<8x5xi32>
    %29 = arith.cmpi sle, %23, %28 : vector<8x5xi32>
    %30 = arith.andi %27, %29 : vector<8x5xi1>
    %cst_17 = arith.constant 0.000000e+00 : f32
    %31 = vector.broadcast %cst_17 : f32 to vector<8x5xf32>
    %32 = arith.subf %31, %22 : vector<8x5xf32>
    %33 = math.exp %32 : vector<8x5xf32>
    %cst_18 = arith.constant 1.000000e+00 : f32
    %34 = vector.broadcast %cst_18 : f32 to vector<8x5xf32>
    %35 = arith.addf %34, %33 : vector<8x5xf32>
    %36 = tpu.reciprocal %35 {approx = true} : vector<8x5xf32> -> vector<8x5xf32>
    %cst_19 = arith.constant 9.990000e-03 : f32
    %37 = vector.broadcast %cst_19 : f32 to vector<8x5xf32>
    %38 = arith.mulf %37, %36 : vector<8x5xf32>
    %cst_20 = arith.constant 9.99999974E-6 : f32
    %39 = vector.broadcast %cst_20 : f32 to vector<8x5xf32>
    %40 = arith.addf %39, %38 : vector<8x5xf32>
    %cst_21 = arith.constant -1.000000e+30 : f32
    %41 = vector.broadcast %cst_21 : f32 to vector<8x5xf32>
    %42 = arith.select %30, %22, %41 : vector<8x5xi1>, vector<8x5xf32>
    %cst_22 = arith.constant dense<0xFF800000> : vector<8xf32>
    %43 = vector.multi_reduction <maximumf>, %42, %cst_22 [1] : vector<8x5xf32> to vector<8xf32>
    %44 = vector.shape_cast %43 : vector<8xf32> to vector<8x1xf32>
    %45 = vector.broadcast %44 : vector<8x1xf32> to vector<8x5xf32>
    %46 = arith.subf %22, %45 : vector<8x5xf32>
    %47 = math.exp %46 : vector<8x5xf32>
    %cst_23 = arith.constant 0.000000e+00 : f32
    %48 = vector.broadcast %cst_23 : f32 to vector<8x5xf32>
    %49 = arith.select %30, %47, %48 : vector<8x5xi1>, vector<8x5xf32>
    %cst_24 = arith.constant dense<0.000000e+00> : vector<8xf32>
    %50 = vector.multi_reduction <add>, %49, %cst_24 [1] : vector<8x5xf32> to vector<8xf32>
    %51 = vector.shape_cast %50 : vector<8xf32> to vector<8x1xf32>
    %52 = tpu.reciprocal %51 {approx = true} : vector<8x1xf32> -> vector<8x1xf32>
    %53 = vector.broadcast %52 : vector<8x1xf32> to vector<8x5xf32>
    %54 = arith.mulf %49, %53 : vector<8x5xf32>
    %55 = arith.select %30, %54, %36 : vector<8x5xi1>, vector<8x5xf32>
    %56 = arith.select %25, %40, %55 : vector<8x5xi1>, vector<8x5xf32>
    %c0_25 = arith.constant 0 : index
    %c0_26 = arith.constant 0 : index
    %57 = vector.load %arg8[%c0_25, %c0_26] : memref<8x5xf32, #tpu.memory_space<vmem>>, vector<8x5xf32>
    tpu.vector_store %arg8[%c0_25, %c0_26], %56 {strides = array<i32>} : memref<8x5xf32, #tpu.memory_space<vmem>>, vector<8x5xf32>,
    return
  }
  func.func @transform_0(%arg0: i32) -> (i32, i32) {
    %c0_i32 = arith.constant 0 : i32
    %c0_i32_0 = arith.constant 0 : i32
    return %arg0, %c0_i32 : i32, i32
  }
  func.func @transform_1(%arg0: i32) -> (i32, i32) {
    %c0_i32 = arith.constant 0 : i32
    %c0_i32_0 = arith.constant 0 : i32
    %c0_i32_1 = arith.constant 0 : i32
    return %c0_i32, %c0_i32_0 : i32, i32
  }
  func.func @transform_2(%arg0: i32) -> (i32, i32) {
    %c0_i32 = arith.constant 0 : i32
    %c0_i32_0 = arith.constant 0 : i32
    %c0_i32_1 = arith.constant 0 : i32
    return %c0_i32, %c0_i32_0 : i32, i32
  }
  func.func @transform_3(%arg0: i32) -> (i32, i32) {
    %c0_i32 = arith.constant 0 : i32
    %c0_i32_0 = arith.constant 0 : i32
    %c0_i32_1 = arith.constant 0 : i32
    return %c0_i32, %c0_i32_0 : i32, i32
  }
  func.func @transform_4(%arg0: i32) -> (i32, i32) {
    %c0_i32 = arith.constant 0 : i32
    %c0_i32_0 = arith.constant 0 : i32
    %c0_i32_1 = arith.constant 0 : i32
    return %c0_i32, %c0_i32_0 : i32, i32
  }
  func.func @transform_5(%arg0: i32) -> (i32, i32) {
    %c0_i32 = arith.constant 0 : i32
    %c0_i32_0 = arith.constant 0 : i32
    %c0_i32_1 = arith.constant 0 : i32
    return %c0_i32, %c0_i32_0 : i32, i32
  }
  func.func @transform_6(%arg0: i32) -> (i32, i32) {
    %c0_i32 = arith.constant 0 : i32
    %c0_i32_0 = arith.constant 0 : i32
    %c0_i32_1 = arith.constant 0 : i32
    return %c0_i32, %c0_i32_0 : i32, i32
  }
  func.func @transform_7(%arg0: i32) -> (i32, i32) {
    %c0_i32 = arith.constant 0 : i32
    %c0_i32_0 = arith.constant 0 : i32
    return %arg0, %c0_i32 : i32, i32
  }
}

</mosaic_0001>

<llo_original>
// kernel: tpu_custom_call.1
$region0: #{tpu_custom_call.1}
  #allocation0 [shape = 'u32[]', space=smem, size = 0x4, offset = 0x4, fixed_abs, tag = 'smem constant byte address 0x4 - core index']
  #allocation1 [shape = 'u32[72,128]{1,0:T(1,128)}', space=vmem, size = 0x9000, scoped, tag = 'internal scratch']
  %s0 = inlined_call_operand.vmem [shape: f32[8,32], index: 0, kind: input, shape index: {}]
  %s1 = inlined_call_operand.vmem [shape: bf16[32,256], index: 1, kind: input, shape index: {}]
  %s2 = inlined_call_operand.vmem [shape: f32[1,256], index: 2, kind: input, shape index: {}]
  %s3 = inlined_call_operand.hbm [shape: bf16[256,128], index: 3, kind: input, shape index: {}]
  %s4 = inlined_call_operand.vmem [shape: f32[1,128], index: 4, kind: input, shape index: {}]
  %s5 = inlined_call_operand.vmem [shape: bf16[128,5], index: 5, kind: input, shape index: {}]
  %s6 = inlined_call_operand.vmem [shape: f32[1,5], index: 6, kind: input, shape index: {}]
  %s7 = inlined_call_operand.hbm [shape: f32[8,5], index: 7, kind: output, shape index: {}]
  %s8 = sld [smem:[#allocation0]]
  $region42: #{tpu_custom_call.1} parent=0
    _
  %s10 = ssub.s32 1, %s8
  %s11 = scalar_select 0, %s10, %s8
  $region1: #{tpu_custom_call.1} parent=0
    #allocation2 [shape = 'u8[65536]{0}', space=vmem, size = 0x10000, scoped, tag = 'input window, operand 3, single buffered']
    #allocation3 [shape = 's32[1]{0}', space=sflag, size = 0x4, scoped, tag = 'scoped memory for tpu_custom_call.1']
    #allocation4 [shape = 's32[1]{0}', space=sflag, size = 0x4, scoped, tag = 'scoped memory for tpu_custom_call.1']
    #allocation5 [shape = 'u8[4096]{0}', space=vmem, size = 0x1000, scoped, tag = 'output window, operand 0, single buffered']
    %12 = vsyncpa [#allocation3], 0
    %13 = vsyncpa [#allocation4], 0
    // Predicated region
    $region2: #{tpu_custom_call.1} parent=1 // pred_check
      _
    $region3: #{tpu_custom_call.1} parent=1 // pred_check_branch
      %15 = sbr.rel (0) target = $region5
    $region4: #{tpu_custom_call.1} parent=1 // pred_region
      _
    $region5: #{tpu_custom_call.1} parent=1 // pred_fallthru
      _
    // Predicated region
    $region6: #{tpu_custom_call.1} parent=1 // pred_check
      _
    $region7: #{tpu_custom_call.1} parent=1 // pred_check_branch
      %17 = sbr.rel (0) target = $region9
    $region8: #{tpu_custom_call.1} parent=1 // pred_region
      _
    $region9: #{tpu_custom_call.1} parent=1 // pred_fallthru
      _
    // Predicated region
    $region10: #{tpu_custom_call.1} parent=1 // pred_check
      _
    $region11: #{tpu_custom_call.1} parent=1 // pred_check_branch
      %19 = sbr.rel (0) target = $region13
    $region12: #{tpu_custom_call.1} parent=1 // pred_region
      _
    $region13: #{tpu_custom_call.1} parent=1 // pred_fallthru
      _
    // Predicated region
    $region14: #{tpu_custom_call.1} parent=1 // pred_check
      _
    $region15: #{tpu_custom_call.1} parent=1 // pred_check_branch
      %21 = sbr.rel (0) target = $region17
    $region16: #{tpu_custom_call.1} parent=1 // pred_region
      %23 = vsyncadd [#allocation3], 0
      %s24 = sshll.u32 %s3, 4
      %s25 = int_to_ptr.hbm [resolvable:$true] %s24
      %s26 = sshll.u32 [#allocation2], 4
      %s27 = int_to_ptr.vmem [resolvable:$true] %s26
      %32 = dma.hbm_to_vmem [thread:$0]  %s25, 2048, %s27, [#allocation3], 64, 64, 4
    $region17: #{tpu_custom_call.1} parent=1 // pred_fallthru
      _
    // Predicated region
    $region18: #{tpu_custom_call.1} parent=1 // pred_check
      _
    $region19: #{tpu_custom_call.1} parent=1 // pred_check_branch
      %34 = sbr.rel (0) target = $region21
    $region20: #{tpu_custom_call.1} parent=1 // pred_region
      _
    $region21: #{tpu_custom_call.1} parent=1 // pred_fallthru
      _
    // Predicated region
    $region22: #{tpu_custom_call.1} parent=1 // pred_check
      _
    $region23: #{tpu_custom_call.1} parent=1 // pred_check_branch
      %36 = sbr.rel (0) target = $region25
    $region24: #{tpu_custom_call.1} parent=1 // pred_region
      _
    $region25: #{tpu_custom_call.1} parent=1 // pred_fallthru
      _
    // Predicated region
    $region26: #{tpu_custom_call.1} parent=1 // pred_check
      _
    $region27: #{tpu_custom_call.1} parent=1 // pred_check_branch
      %38 = sbr.rel (0) target = $region29
    $region28: #{tpu_custom_call.1} parent=1 // pred_region
      _
    $region29: #{tpu_custom_call.1} parent=1 // pred_fallthru
      _
    // Predicated region
    $region30: #{tpu_custom_call.1} parent=1 // pred_check
      _
    $region31: #{tpu_custom_call.1} parent=1 // pred_check_branch
      %40 = sbr.rel (0) target = $region33
    $region32: #{tpu_custom_call.1} parent=1 // pred_region
      %42 = dma.done [#allocation3], 2048
    $region33: #{tpu_custom_call.1} parent=1 // pred_fallthru
      _
    %v44 = vld [vmem:[%s0] sm:$0xff]
    %v45 = vpack.c.bf16 %v44, %v44
    %v46 = vld [vmem:[%s1] sm:$0xff]
    %v47 = vld [vmem:[%s1 + $0x8] sm:$0xff]
    %v48 = vld [vmem:[%s1 + $0x10] sm:$0xff]
    %v49 = vld [vmem:[%s1 + $0x18] sm:$0xff]
    %v50 = vld [vmem:[%s2] sm:$0x3]
    %v52 = vperm.slane %v50, 0
    %v53 = vperm.slane %v50, 1
    %v60 = vunpack.c.l.b16 %v46
    %v61 = vunpack.c.h.b16 %v46
    %v62 = vunpack.c.l.b16 %v47
    %v63 = vunpack.c.h.b16 %v47
    %v64 = vunpack.c.l.b16 %v48
    %v65 = vunpack.c.h.b16 %v48
    %v66 = vunpack.c.l.b16 %v49
    %v67 = vunpack.c.h.b16 %v49
    %v68 = vpack.c.b16 %v62, %v60
    %v69 = vpack.c.b16 %v63, %v61
    %v70 = vpack.c.b16 %v66, %v64
    %v71 = vpack.c.b16 %v67, %v65
    %vm76 = vcmask 261120
    %v78 = vsel %vm76, %v45, 0
    %80 = vmatpush.bf16.msra.mxu0 0
    %81 = vmatpush.bf16.msra.mxu0 0
    %82 = vmatpush.bf16.msra.mxu0 0
    %83 = vmatpush.bf16.msra.mxu0 0
    %84 = vmatpush.bf16.msra.mxu0 0
    %85 = vmatpush.bf16.msra.mxu0 0
    %86 = vmatpush.bf16.msra.mxu0 %v70
    %87 = vmatpush.bf16.msra.mxu0 %v68
    %88 = vmatmul.bf16.gmra.mxu0 %v78
    %v89 = vpop.f32.mrf.mxu0
    %v90 = vadd.f32 %v52, %v89
    %v91 = vpop.f32.mrf.mxu0
    %92 = vdwg.mxu0
    %93 = vmatpush.bf16.msra.mxu0 0
    %94 = vmatpush.bf16.msra.mxu0 0
    %95 = vmatpush.bf16.msra.mxu0 0
    %96 = vmatpush.bf16.msra.mxu0 0
    %97 = vmatpush.bf16.msra.mxu0 0
    %98 = vmatpush.bf16.msra.mxu0 0
    %99 = vmatpush.bf16.msra.mxu0 %v71
    %100 = vmatpush.bf16.msra.mxu0 %v69
    %101 = vmatmul.bf16.gmra.mxu0 %v78
    %v102 = vpop.f32.mrf.mxu0
    %v103 = vadd.f32 %v53, %v102
    %v104 = vpop.f32.mrf.mxu0
    %105 = vdwg.mxu0
    %v106 = vmax.f32 %v90, 0.0
    %v107 = vmax.f32 %v103, 0.0
    %v108 = vpack.c.bf16 %v106, %v106
    %v109 = vpack.c.bf16 %v107, %v107
    %v110 = vld [vmem:[#allocation2] sm:$0xf]
    %v111 = vld [vmem:[#allocation2 + $0x4] sm:$0xf]
    %v112 = vld [vmem:[#allocation2 + $0x8] sm:$0xf]
    %v113 = vld [vmem:[#allocation2 + $0xc] sm:$0xf]
    %v114 = vld [vmem:[#allocation2 + $0x10] sm:$0xf]
    %v115 = vld [vmem:[#allocation2 + $0x14] sm:$0xf]
    %v116 = vld [vmem:[#allocation2 + $0x18] sm:$0xf]
    %v117 = vld [vmem:[#allocation2 + $0x1c] sm:$0xf]
    %v118 = vld [vmem:[#allocation2 + $0x20] sm:$0xf]
    %v119 = vld [vmem:[#allocation2 + $0x24] sm:$0xf]
    %v120 = vld [vmem:[#allocation2 + $0x28] sm:$0xf]
    %v121 = vld [vmem:[#allocation2 + $0x2c] sm:$0xf]
    %v122 = vld [vmem:[#allocation2 + $0x30] sm:$0xf]
    %v123 = vld [vmem:[#allocation2 + $0x34] sm:$0xf]
    %v124 = vld [vmem:[#allocation2 + $0x38] sm:$0xf]
    %v125 = vld [vmem:[#allocation2 + $0x3c] sm:$0xf]
    %v126 = vld [vmem:[#allocation2 + $0x40] sm:$0xf]
    %v127 = vld [vmem:[#allocation2 + $0x44] sm:$0xf]
    %v128 = vld [vmem:[#allocation2 + $0x48] sm:$0xf]
    %v129 = vld [vmem:[#allocation2 + $0x4c] sm:$0xf]
    %v130 = vld [vmem:[#allocation2 + $0x50] sm:$0xf]
    %v131 = vld [vmem:[#allocation2 + $0x54] sm:$0xf]
    %v132 = vld [vmem:[#allocation2 + $0x58] sm:$0xf]
    %v133 = vld [vmem:[#allocation2 + $0x5c] sm:$0xf]
    %v134 = vld [vmem:[#allocation2 + $0x60] sm:$0xf]
    %v135 = vld [vmem:[#allocation2 + $0x64] sm:$0xf]
    %v136 = vld [vmem:[#allocation2 + $0x68] sm:$0xf]
    %v137 = vld [vmem:[#allocation2 + $0x6c] sm:$0xf]
    %v138 = vld [vmem:[#allocation2 + $0x70] sm:$0xf]
    %v139 = vld [vmem:[#allocation2 + $0x74] sm:$0xf]
    %v140 = vld [vmem:[#allocation2 + $0x78] sm:$0xf]
    %v141 = vld [vmem:[#allocation2 + $0x7c] sm:$0xf]
    %v142 = vld [vmem:[%s4] sm:$0x1]
    %v144 = vperm.slane %v142, 0
    %v178 = vunpack.c.l.b16 %v110
    %v179 = vunpack.c.l.b16 %v111
    %v180 = vunpack.c.l.b16 %v112
    %v181 = vunpack.c.l.b16 %v113
    %v182 = vunpack.c.l.b16 %v114
    %v183 = vunpack.c.l.b16 %v115
    %v184 = vunpack.c.l.b16 %v116
    %v185 = vunpack.c.l.b16 %v117
    %v186 = vunpack.c.l.b16 %v118
    %v187 = vunpack.c.l.b16 %v119
    %v188 = vunpack.c.l.b16 %v120
    %v189 = vunpack.c.l.b16 %v121
    %v190 = vunpack.c.l.b16 %v122
    %v191 = vunpack.c.l.b16 %v123
    %v192 = vunpack.c.l.b16 %v124
    %v193 = vunpack.c.l.b16 %v125
    %v194 = vunpack.c.l.b16 %v126
    %v195 = vunpack.c.l.b16 %v127
    %v196 = vunpack.c.l.b16 %v128
    %v197 = vunpack.c.l.b16 %v129
    %v198 = vunpack.c.l.b16 %v130
    %v199 = vunpack.c.l.b16 %v131
    %v200 = vunpack.c.l.b16 %v132
    %v201 = vunpack.c.l.b16 %v133
    %v202 = vunpack.c.l.b16 %v134
    %v203 = vunpack.c.l.b16 %v135
    %v204 = vunpack.c.l.b16 %v136
    %v205 = vunpack.c.l.b16 %v137
    %v206 = vunpack.c.l.b16 %v138
    %v207 = vunpack.c.l.b16 %v139
    %v208 = vunpack.c.l.b16 %v140
    %v209 = vunpack.c.l.b16 %v141
    %v210 = vpack.c.b16 %v179, %v178
    %v211 = vpack.c.b16 %v181, %v180
    %v212 = vpack.c.b16 %v183, %v182
    %v213 = vpack.c.b16 %v185, %v184
    %v214 = vpack.c.b16 %v187, %v186
    %v215 = vpack.c.b16 %v189, %v188
    %v216 = vpack.c.b16 %v191, %v190
    %v217 = vpack.c.b16 %v193, %v192
    %v218 = vpack.c.b16 %v195, %v194
    %v219 = vpack.c.b16 %v197, %v196
    %v220 = vpack.c.b16 %v199, %v198
    %v221 = vpack.c.b16 %v201, %v200
    %v222 = vpack.c.b16 %v203, %v202
    %v223 = vpack.c.b16 %v205, %v204
    %v224 = vpack.c.b16 %v207, %v206
    %v225 = vpack.c.b16 %v209, %v208
    %242 = vmatpush.bf16.msra.mxu0 %v217
    %243 = vmatpush.bf16.msra.mxu0 %v216
    %244 = vmatpush.bf16.msra.mxu0 %v215
    %245 = vmatpush.bf16.msra.mxu0 %v214
    %246 = vmatpush.bf16.msra.mxu0 %v213
    %247 = vmatpush.bf16.msra.mxu0 %v212
    %248 = vmatpush.bf16.msra.mxu0 %v211
    %249 = vmatpush.bf16.msra.mxu0 %v210
    %250 = vmatmul.bf16.gmra.mxu0 %v108
    %v251 = vpop.f32.mrf.mxu0
    %v252 = vadd.f32 %v144, %v251
    %v253 = vpop.f32.mrf.mxu0
    %254 = vdwg.mxu0
    %255 = vmatpush.bf16.msra.mxu0 %v225
    %256 = vmatpush.bf16.msra.mxu0 %v224
    %257 = vmatpush.bf16.msra.mxu0 %v223
    %258 = vmatpush.bf16.msra.mxu0 %v222
    %259 = vmatpush.bf16.msra.mxu0 %v221
    %260 = vmatpush.bf16.msra.mxu0 %v220
    %261 = vmatpush.bf16.msra.mxu0 %v219
    %262 = vmatpush.bf16.msra.mxu0 %v218
    %263 = vmatmul.bf16.gmra.mxu0 %v109
    %v264 = vpop.f32.mrf.mxu0
    %v265 = vadd.f32 %v252, %v264
    %v266 = vpop.f32.mrf.mxu0
    %267 = vdwg.mxu0
    %v268 = vmax.f32 %v265, 0.0
    %v269 = vpack.c.bf16 %v268, %v268
    %v270 = vld [vmem:[%s5] sm:$0xf]
    %v271 = vld [vmem:[%s5 + $0x4] sm:$0xf]
    %v272 = vld [vmem:[%s5 + $0x8] sm:$0xf]
    %v273 = vld [vmem:[%s5 + $0xc] sm:$0xf]
    %v274 = vld [vmem:[%s5 + $0x10] sm:$0xf]
    %v275 = vld [vmem:[%s5 + $0x14] sm:$0xf]
    %v276 = vld [vmem:[%s5 + $0x18] sm:$0xf]
    %v277 = vld [vmem:[%s5 + $0x1c] sm:$0xf]
    %v278 = vld [vmem:[%s5 + $0x20] sm:$0xf]
    %v279 = vld [vmem:[%s5 + $0x24] sm:$0xf]
    %v280 = vld [vmem:[%s5 + $0x28] sm:$0xf]
    %v281 = vld [vmem:[%s5 + $0x2c] sm:$0xf]
    %v282 = vld [vmem:[%s5 + $0x30] sm:$0xf]
    %v283 = vld [vmem:[%s5 + $0x34] sm:$0xf]
    %v284 = vld [vmem:[%s5 + $0x38] sm:$0xf]
    %v285 = vld [vmem:[%s5 + $0x3c] sm:$0xf]
    %v286 = vld [vmem:[%s6] sm:$0x1]
    %v288 = vperm.slane %v286, 0
    %v306 = vunpack.c.l.b16 %v270
    %v307 = vunpack.c.l.b16 %v271
    %v308 = vunpack.c.l.b16 %v272
    %v309 = vunpack.c.l.b16 %v273
    %v310 = vunpack.c.l.b16 %v274
    %v311 = vunpack.c.l.b16 %v275
    %v312 = vunpack.c.l.b16 %v276
    %v313 = vunpack.c.l.b16 %v277
    %v314 = vunpack.c.l.b16 %v278
    %v315 = vunpack.c.l.b16 %v279
    %v316 = vunpack.c.l.b16 %v280
    %v317 = vunpack.c.l.b16 %v281
    %v318 = vunpack.c.l.b16 %v282
    %v319 = vunpack.c.l.b16 %v283
    %v320 = vunpack.c.l.b16 %v284
    %v321 = vunpack.c.l.b16 %v285
    %v322 = vpack.c.b16 %v307, %v306
    %v323 = vpack.c.b16 %v309, %v308
    %v324 = vpack.c.b16 %v311, %v310
    %v325 = vpack.c.b16 %v313, %v312
    %v326 = vpack.c.b16 %v315, %v314
    %v327 = vpack.c.b16 %v317, %v316
    %v328 = vpack.c.b16 %v319, %v318
    %v329 = vpack.c.b16 %v321, %v320
    %338 = vmatpush.bf16.msra.mxu0 %v329
    %339 = vmatpush.bf16.msra.mxu0 %v328
    %340 = vmatpush.bf16.msra.mxu0 %v327
    %341 = vmatpush.bf16.msra.mxu0 %v326
    %342 = vmatpush.bf16.msra.mxu0 %v325
    %343 = vmatpush.bf16.msra.mxu0 %v324
    %344 = vmatpush.bf16.msra.mxu0 %v323
    %345 = vmatpush.bf16.msra.mxu0 %v322
    %346 = vmatmul.bf16.gmra.mxu0 %v269
    %v347 = vpop.f32.mrf.mxu0
    %v348 = vadd.f32 %v288, %v347
    %v349 = vpop.f32.mrf.mxu0
    %350 = vdwg.mxu0
    %v351 = vlaneseq
    %v352 = vand.u32 %v351, 127
    %vm353 = vcmp.eq.s32.totalorder %v352, 0
    %vm354 = vcmp.ge.s32.totalorder %v352, 1
    %vm355 = vcmp.le.s32.totalorder %v352, 3
    %vm356 = vmand %vm354, %vm355
    %v357 = vsub.f32 0.0, %v348
    %v358 = vmul.f32 %v357, 1.442695
    %v359 = vpow.pop %v358
    %v360 = vadd.f32 %v359, 1.0
    %v361 = vrcp.pop %v360
    %v362 = vmul.f32 %v361, 0.00999
    %v363 = vadd.f32 %v362, 1e-05
    %v364 = vsel %vm356, %v348, -1e+30
    %vm365 = vcmask 39936
    %v366 = vsel %vm365, %v364, -inf
    %367 = vmax.xlane.f32.xlu0 %v366
    %v368 = vpop.xlane.xlu0 %367
    %v369 = vsub.f32 %v348, %v368
    %v370 = vmul.f32 %v369, 1.442695
    %v371 = vpow.pop %v370
    %v372 = vsel %vm356, %v371, 0.0
    %v373 = vsel %vm365, %v372, 0.0
    %374 = vadd.xlane.f32.xlu0 %v373
    %v375 = vpop.xlane.xlu0 %374
    %v376 = vrcp.pop %v375
    %v377 = vmul.f32 %v372, %v376
    %v378 = vsel %vm356, %v377, %v361
    %v379 = vsel %vm353, %v363, %v378
    %380 = vst.msk [vmem:[#allocation5] sm:$0xff] %vm365, %v379
    // Predicated region
    $region34: #{tpu_custom_call.1} parent=1 // pred_check
      _
    $region35: #{tpu_custom_call.1} parent=1 // pred_check_branch
      %382 = sbr.rel (0) target = $region37
    $region36: #{tpu_custom_call.1} parent=1 // pred_region
      %384 = vsyncadd [#allocation4], 0
      %s386 = sshll.u32 [#allocation5], 4
      %s387 = int_to_ptr.vmem [resolvable:$true] %s386
      %s388 = sshll.u32 %s7, 4
      %s389 = int_to_ptr.hbm [resolvable:$true] %s388
      %391 = dma.vmem_to_hbm [thread:$0]  %s387, 128, %s389, [#allocation4]
    $region37: #{tpu_custom_call.1} parent=1 // pred_fallthru
      _
    // Predicated region
    $region38: #{tpu_custom_call.1} parent=1 // pred_check
      _
    $region39: #{tpu_custom_call.1} parent=1 // pred_check_branch
      %393 = sbr.rel (0) target = $region41
    $region40: #{tpu_custom_call.1} parent=1 // pred_region
      %395 = dma.done [#allocation4], 128
    $region41: #{tpu_custom_call.1} parent=1 // pred_fallthru
      _
    %396 = vsyncpa [#allocation3], 1
    %397 = vsyncpa [#allocation4], 1

</llo_original>
